<compile_context>
chip_gen: v7x
topology: tpu7x:2x2x1
jax: 0.10.0
libtpu: 0.0.40
codegen_flags: <defaults>
</compile_context>

<pallas_src>
import jax
import jax.numpy as jnp
from jax.experimental import pallas as pl
from jax.experimental.pallas import tpu as pltpu


_LANES = 128
_SUBLANES = 8


def _vmem_budget_bytes():
    """Generation-aware VMEM budget (128 MiB physical on v5e/v6e, 64 MiB on v7x)."""
    phys = 64 << 20                       # conservative fallback = v7x per-core VMEM
    try:
        info = pltpu.get_tpu_info()
        phys = int(getattr(info, "vmem_capacity_bytes", phys)) or phys
    except Exception:
        pass
    # Use ~2/3 of physical VMEM; leave the rest for compiler scratch / spills.
    return int(min(max((phys * 2) // 3, 16 << 20), 96 << 20))


def _choose_rows(c, r_total, itemsize, vmem_budget):
    """Rows of 128 voxels per tile: multiple of 8, as big as the VMEM budget allows."""
    per_row = _LANES * (2 * c * itemsize      # double-buffered logits tile
                        + 2 * 4               # double-buffered int32 target tile
                        + 16 * 4)             # f32 intermediates (m, se, picked, nll, masks, ...)
    rows = (vmem_budget - (2 << 20)) // per_row
    rows = min(rows, 16384)                   # keep per-step latency / codegen sane
    rows = max(_SUBLANES, (rows // _SUBLANES) * _SUBLANES)
    return int(min(rows, r_total))


def _make_kernel(*, c, t_rows, r_total, ignore_label, has_weight):
    groups = t_rows // _SUBLANES
    ragged = (r_total % t_rows) != 0          # only the last row-tile can read OOB rows

    def body(logits_ref, target_ref, weight_ref, num_ref, den_ref):
        t = target_ref[0]                                       # (t_rows, 128) int32

        # Running max over classes.  Classes are a leading (untiled) axis, so
        # this is plain VALU work on full (8,128) vregs — no XLU reductions.
        m = logits_ref[0, 0].astype(jnp.float32)                # (t_rows, 128)
        for k in range(1, c):
            m = jnp.maximum(m, logits_ref[0, k].astype(jnp.float32))

        se = jnp.zeros((t_rows, _LANES), jnp.float32)
        picked = jnp.zeros((t_rows, _LANES), jnp.float32)
        picked_w = jnp.zeros((t_rows, _LANES), jnp.float32) if has_weight else None
        for k in range(c):
            xk = logits_ref[0, k].astype(jnp.float32)
            se = se + jnp.exp(xk - m)
            is_k = t == k
            picked = jnp.where(is_k, xk, picked)                # select — no onehot mul
            if has_weight:
                picked_w = jnp.where(is_k, weight_ref[k], picked_w)  # scalar from SMEM

        nll = m + jnp.log(se) - picked          # == -log_softmax(x)[target]

        valid = (t >= 0) & (t < c) & (t != ignore_label)
        if ragged:
            j = pl.program_id(1)
            row = jax.lax.broadcasted_iota(jnp.int32, (t_rows, _LANES), 0)
            valid = valid & ((j * t_rows + row) < r_total)

        if has_weight:
            den = jnp.where(valid, picked_w, 0.0)
        else:
            den = valid.astype(jnp.float32)     # weight=None fast path
        # Keep selects (not mask-multiplies) so NaN/Inf from padded / OOB
        # columns can never leak into the accumulators.
        num = den * jnp.where(valid, nll, 0.0)

        # Reduce to an (8,128) slab with slab-wise VALU adds (free reshape, no XLU).
        num_ref[...] = num.reshape(groups, _SUBLANES, _LANES).sum(axis=0)[None, None]
        den_ref[...] = den.reshape(groups, _SUBLANES, _LANES).sum(axis=0)[None, None]

    if has_weight:
        def kernel(logits_ref, target_ref, weight_ref, num_ref, den_ref):
            body(logits_ref, target_ref, weight_ref, num_ref, den_ref)
    else:
        def kernel(logits_ref, target_ref, num_ref, den_ref):
            body(logits_ref, target_ref, None, num_ref, den_ref)
    return kernel


def cross_entropy_3d(predict, target, weight=None, *, ignore_label=255,
                     block_rows=None):
    """predict: (n, c, d, h, w) float, target: (n, d, h, w) int."""
    n, c, d, h, w = predict.shape
    assert target.shape == (n, d, h, w)
    s_total = d * h * w

    # Voxels become (R, 128) lane/sublane-dense rows, R a multiple of 8.
    # Padding only happens when S is not a multiple of 1024 (one extra HBM copy
    # in that case; zero cost for the common aligned case).
    r_total = pl.cdiv(s_total, _SUBLANES * _LANES) * _SUBLANES
    s_pad = r_total * _LANES

    logits = predict.reshape(n, c, s_total)
    tgt = target.reshape(n, s_total).astype(jnp.int32)
    if s_pad != s_total:
        pad = s_pad - s_total
        logits = jnp.pad(logits, ((0, 0), (0, 0), (0, pad)))
        tgt = jnp.pad(tgt, ((0, 0), (0, pad)), constant_values=-1)   # padded => invalid
    logits = logits.reshape(n, c, r_total, _LANES)
    tgt = tgt.reshape(n, r_total, _LANES)

    itemsize = jnp.dtype(predict.dtype).itemsize
    vmem_cap = _vmem_budget_bytes()
    if block_rows is None:
        t_rows = _choose_rows(c, r_total, itemsize, vmem_cap)
    else:
        t_rows = min(r_total, max(_SUBLANES, (int(block_rows) // _SUBLANES) * _SUBLANES))
    num_tiles = pl.cdiv(r_total, t_rows)

    has_weight = weight is not None
    kernel = _make_kernel(c=c, t_rows=t_rows, r_total=r_total,
                          ignore_label=int(ignore_label), has_weight=has_weight)

    in_specs = [
        pl.BlockSpec((1, c, t_rows, _LANES), lambda b, j: (b, 0, j, 0)),   # logits tile
        pl.BlockSpec((1, t_rows, _LANES), lambda b, j: (b, j, 0)),         # target tile
    ]
    args = [logits, tgt]
    if has_weight:
        in_specs.append(pl.BlockSpec(memory_space=pltpu.MemorySpace.SMEM))  # (c,) weight table
        args.append(jnp.asarray(weight, jnp.float32).reshape(c))

    # One independent (8,128) partial-sum slab per (batch, voxel-tile) grid step.
    out_specs = [
        pl.BlockSpec((1, 1, _SUBLANES, _LANES), lambda b, j: (b, j, 0, 0)),
        pl.BlockSpec((1, 1, _SUBLANES, _LANES), lambda b, j: (b, j, 0, 0)),
    ]
    out_shape = (jax.ShapeDtypeStruct((n, num_tiles, _SUBLANES, _LANES), jnp.float32),
                 jax.ShapeDtypeStruct((n, num_tiles, _SUBLANES, _LANES), jnp.float32))

    num_part, den_part = pl.pallas_call(
        kernel,
        out_shape=out_shape,
        grid_spec=pltpu.PrefetchScalarGridSpec(
            num_scalar_prefetch=0,
            grid=(n, num_tiles),
            in_specs=in_specs,
            out_specs=out_specs,
        ),
        compiler_params=pltpu.CompilerParams(
            dimension_semantics=("parallel", "parallel"),
            vmem_limit_bytes=int(vmem_cap)),
    )(*args)

    num = jnp.sum(num_part)
    den = jnp.sum(den_part)
    # PyTorch returns zeros when no valid targets exist.
    return jnp.where(den > 0, num / jnp.maximum(den, 1e-30), jnp.float32(0.0))


def _reference(predict, target, weight=None, ignore_label=255):
    n, c, d, h, w = predict.shape
    logits = jnp.transpose(predict, (0, 2, 3, 4, 1)).reshape(-1, c).astype(jnp.float32)
    t = target.reshape(-1).astype(jnp.int32)
    valid = (t >= 0) & (t != ignore_label)
    logp = jax.nn.log_softmax(logits, axis=-1)
    t_safe = jnp.clip(t, 0, c - 1)
    nll = -jnp.take_along_axis(logp, t_safe[:, None], axis=1)[:, 0]
    wv = jnp.ones((c,), jnp.float32) if weight is None else jnp.asarray(weight, jnp.float32)
    wt = wv[t_safe]
    num = jnp.sum(jnp.where(valid, wt * nll, 0.0))
    den = jnp.sum(jnp.where(valid, wt, 0.0))
    return jnp.where(den > 0, num / den, 0.0)


if __name__ == "__main__":
    key = jax.random.PRNGKey(0)
    k1, k2, k3, k4, k5 = jax.random.split(key, 5)
    ignore_label = 255

    # --- Test 1: aligned S (=2048), weight=None fast path, auto tile size ---
    n, c, d, h, w = 2, 4, 8, 16, 16
    predict = jax.random.normal(k1, (n, c, d, h, w), jnp.float32)
    target = jax.random.randint(k2, (n, d, h, w), 0, c, jnp.int32)
    target = jnp.where(jax.random.uniform(k3, (n, d, h, w)) < 0.1,
                       jnp.int32(ignore_label), target)
    loss = jax.block_until_ready(
        cross_entropy_3d(predict, target, ignore_label=ignore_label))
    ref = _reference(predict, target, ignore_label=ignore_label)
    assert jnp.allclose(loss, ref, rtol=1e-5, atol=1e-5), (loss, ref)

    # --- Test 2: ragged voxel count (S=192 -> padded) + class weights (SMEM) ---
    n2, c2, d2, h2, w2 = 2, 4, 4, 6, 8
    predict2 = jax.random.normal(k4, (n2, c2, d2, h2, w2), jnp.float32)
    target2 = jax.random.randint(k2, (n2, d2, h2, w2), 0, c2, jnp.int32)
    weight2 = jnp.array([0.5, 1.0, 2.0, 0.25], jnp.float32)
    loss2 = jax.block_until_ready(
        cross_entropy_3d(predict2, target2, weight2, ignore_label=ignore_label))
    ref2 = _reference(predict2, target2, weight2, ignore_label=ignore_label)
    assert jnp.allclose(loss2, ref2, rtol=1e-5, atol=1e-5), (loss2, ref2)

    # --- Test 3: multi-tile grid with a ragged last row-tile (R=24, tile=16 rows) ---
    n3, c3, d3, h3, w3 = 1, 3, 3, 8, 128
    predict3 = jax.random.normal(k5, (n3, c3, d3, h3, w3), jnp.float32)
    target3 = jax.random.randint(k1, (n3, d3, h3, w3), 0, c3, jnp.int32)
    target3 = jnp.where(jax.random.uniform(k2, (n3, d3, h3, w3)) < 0.2,
                        jnp.int32(ignore_label), target3)
    weight3 = jnp.array([0.2, 1.0, 3.0], jnp.float32)
    loss3 = jax.block_until_ready(
        cross_entropy_3d(predict3, target3, weight3,
                         ignore_label=ignore_label, block_rows=16))
    ref3 = _reference(predict3, target3, weight3, ignore_label=ignore_label)
    assert jnp.allclose(loss3, ref3, rtol=1e-5, atol=1e-5), (loss3, ref3)

    print("KERNEL_OK")
</pallas_src>

<mosaic_0001>
module attributes {stable_mosaic.version = 11 : i64} {
  func.func @kernel(%arg0: i32, %arg1: i32, %arg2: memref<1x4x16x128xf32, #tpu.memory_space<vmem>>, %arg3: memref<1x16x128xi32, #tpu.memory_space<vmem>>, %arg4: memref<1x1x8x128xf32, #tpu.memory_space<vmem>>, %arg5: memref<1x1x8x128xf32, #tpu.memory_space<vmem>>) attributes {dimension_semantics = [#tpu.dimension_semantics<parallel>, #tpu.dimension_semantics<parallel>], iteration_bounds = array<i64: 2, 1>, scalar_prefetch = 0 : i64, scratch_operands = 0 : i64, tpu.core_type = #tpu.core_type<tc>, window_params = [{transform_indices = @transform_0, window_bounds = array<i64: 1, 4, 16, 128>}, {transform_indices = @transform_1, window_bounds = array<i64: 1, 16, 128>}, {transform_indices = @transform_2, window_bounds = array<i64: 1, 1, 8, 128>}, {transform_indices = @transform_3, window_bounds = array<i64: 1, 1, 8, 128>}]} {
    %c0 = arith.constant 0 : index
    %c0_0 = arith.constant 0 : index
    %c0_1 = arith.constant 0 : index
    %0 = vector.load %arg3[%c0, %c0_0, %c0_1] : memref<1x16x128xi32, #tpu.memory_space<vmem>>, vector<1x16x128xi32>
    %1 = vector.shape_cast %0 : vector<1x16x128xi32> to vector<16x128xi32>
    %c0_2 = arith.constant 0 : index
    %c0_3 = arith.constant 0 : index
    %c0_4 = arith.constant 0 : index
    %c0_5 = arith.constant 0 : index
    %2 = vector.load %arg2[%c0_2, %c0_3, %c0_4, %c0_5] : memref<1x4x16x128xf32, #tpu.memory_space<vmem>>, vector<1x1x16x128xf32>
    %3 = vector.shape_cast %2 : vector<1x1x16x128xf32> to vector<16x128xf32>
    %c0_6 = arith.constant 0 : index
    %c1 = arith.constant 1 : index
    %c0_7 = arith.constant 0 : index
    %c0_8 = arith.constant 0 : index
    %4 = vector.load %arg2[%c0_6, %c1, %c0_7, %c0_8] : memref<1x4x16x128xf32, #tpu.memory_space<vmem>>, vector<1x1x16x128xf32>
    %5 = vector.shape_cast %4 : vector<1x1x16x128xf32> to vector<16x128xf32>
    %6 = arith.maximumf %3, %5 : vector<16x128xf32>
    %c0_9 = arith.constant 0 : index
    %c2 = arith.constant 2 : index
    %c0_10 = arith.constant 0 : index
    %c0_11 = arith.constant 0 : index
    %7 = vector.load %arg2[%c0_9, %c2, %c0_10, %c0_11] : memref<1x4x16x128xf32, #tpu.memory_space<vmem>>, vector<1x1x16x128xf32>
    %8 = vector.shape_cast %7 : vector<1x1x16x128xf32> to vector<16x128xf32>
    %9 = arith.maximumf %6, %8 : vector<16x128xf32>
    %c0_12 = arith.constant 0 : index
    %c3 = arith.constant 3 : index
    %c0_13 = arith.constant 0 : index
    %c0_14 = arith.constant 0 : index
    %10 = vector.load %arg2[%c0_12, %c3, %c0_13, %c0_14] : memref<1x4x16x128xf32, #tpu.memory_space<vmem>>, vector<1x1x16x128xf32>
    %11 = vector.shape_cast %10 : vector<1x1x16x128xf32> to vector<16x128xf32>
    %12 = arith.maximumf %9, %11 : vector<16x128xf32>
    %cst = arith.constant 0.000000e+00 : f32
    %13 = vector.broadcast %cst : f32 to vector<16x128xf32>
    %cst_15 = arith.constant 0.000000e+00 : f32
    %14 = vector.broadcast %cst_15 : f32 to vector<16x128xf32>
    %c0_16 = arith.constant 0 : index
    %c0_17 = arith.constant 0 : index
    %c0_18 = arith.constant 0 : index
    %c0_19 = arith.constant 0 : index
    %15 = vector.load %arg2[%c0_16, %c0_17, %c0_18, %c0_19] : memref<1x4x16x128xf32, #tpu.memory_space<vmem>>, vector<1x1x16x128xf32>
    %16 = vector.shape_cast %15 : vector<1x1x16x128xf32> to vector<16x128xf32>
    %17 = arith.subf %16, %12 : vector<16x128xf32>
    %18 = math.exp %17 : vector<16x128xf32>
    %19 = arith.addf %13, %18 : vector<16x128xf32>
    %c0_i32 = arith.constant 0 : i32
    %20 = vector.broadcast %c0_i32 : i32 to vector<16x128xi32>
    %21 = arith.cmpi eq, %1, %20 : vector<16x128xi32>
    %22 = arith.select %21, %16, %14 : vector<16x128xi1>, vector<16x128xf32>
    %c0_20 = arith.constant 0 : index
    %c1_21 = arith.constant 1 : index
    %c0_22 = arith.constant 0 : index
    %c0_23 = arith.constant 0 : index
    %23 = vector.load %arg2[%c0_20, %c1_21, %c0_22, %c0_23] : memref<1x4x16x128xf32, #tpu.memory_space<vmem>>, vector<1x1x16x128xf32>
    %24 = vector.shape_cast %23 : vector<1x1x16x128xf32> to vector<16x128xf32>
    %25 = arith.subf %24, %12 : vector<16x128xf32>
    %26 = math.exp %25 : vector<16x128xf32>
    %27 = arith.addf %19, %26 : vector<16x128xf32>
    %c1_i32 = arith.constant 1 : i32
    %28 = vector.broadcast %c1_i32 : i32 to vector<16x128xi32>
    %29 = arith.cmpi eq, %1, %28 : vector<16x128xi32>
    %30 = arith.select %29, %24, %22 : vector<16x128xi1>, vector<16x128xf32>
    %c0_24 = arith.constant 0 : index
    %c2_25 = arith.constant 2 : index
    %c0_26 = arith.constant 0 : index
    %c0_27 = arith.constant 0 : index
    %31 = vector.load %arg2[%c0_24, %c2_25, %c0_26, %c0_27] : memref<1x4x16x128xf32, #tpu.memory_space<vmem>>, vector<1x1x16x128xf32>
    %32 = vector.shape_cast %31 : vector<1x1x16x128xf32> to vector<16x128xf32>
    %33 = arith.subf %32, %12 : vector<16x128xf32>
    %34 = math.exp %33 : vector<16x128xf32>
    %35 = arith.addf %27, %34 : vector<16x128xf32>
    %c2_i32 = arith.constant 2 : i32
    %36 = vector.broadcast %c2_i32 : i32 to vector<16x128xi32>
    %37 = arith.cmpi eq, %1, %36 : vector<16x128xi32>
    %38 = arith.select %37, %32, %30 : vector<16x128xi1>, vector<16x128xf32>
    %c0_28 = arith.constant 0 : index
    %c3_29 = arith.constant 3 : index
    %c0_30 = arith.constant 0 : index
    %c0_31 = arith.constant 0 : index
    %39 = vector.load %arg2[%c0_28, %c3_29, %c0_30, %c0_31] : memref<1x4x16x128xf32, #tpu.memory_space<vmem>>, vector<1x1x16x128xf32>
    %40 = vector.shape_cast %39 : vector<1x1x16x128xf32> to vector<16x128xf32>
    %41 = arith.subf %40, %12 : vector<16x128xf32>
    %42 = math.exp %41 : vector<16x128xf32>
    %43 = arith.addf %35, %42 : vector<16x128xf32>
    %c3_i32 = arith.constant 3 : i32
    %44 = vector.broadcast %c3_i32 : i32 to vector<16x128xi32>
    %45 = arith.cmpi eq, %1, %44 : vector<16x128xi32>
    %46 = arith.select %45, %40, %38 : vector<16x128xi1>, vector<16x128xf32>
    %47 = math.log %43 : vector<16x128xf32>
    %48 = arith.addf %12, %47 : vector<16x128xf32>
    %49 = arith.subf %48, %46 : vector<16x128xf32>
    %c0_i32_32 = arith.constant 0 : i32
    %50 = vector.broadcast %c0_i32_32 : i32 to vector<16x128xi32>
    %51 = arith.cmpi sge, %1, %50 : vector<16x128xi32>
    %c4_i32 = arith.constant 4 : i32
    %52 = vector.broadcast %c4_i32 : i32 to vector<16x128xi32>
    %53 = arith.cmpi slt, %1, %52 : vector<16x128xi32>
    %54 = arith.andi %51, %53 : vector<16x128xi1>
    %c255_i32 = arith.constant 255 : i32
    %55 = vector.broadcast %c255_i32 : i32 to vector<16x128xi32>
    %56 = arith.cmpi ne, %1, %55 : vector<16x128xi32>
    %57 = arith.andi %54, %56 : vector<16x128xi1>
    %58 = arith.extui %57 : vector<16x128xi1> to vector<16x128xi32>
    %59 = arith.sitofp %58 : vector<16x128xi32> to vector<16x128xf32>
    %cst_33 = arith.constant 0.000000e+00 : f32
    %60 = vector.broadcast %cst_33 : f32 to vector<16x128xf32>
    %61 = arith.select %57, %49, %60 : vector<16x128xi1>, vector<16x128xf32>
    %62 = arith.mulf %59, %61 : vector<16x128xf32>
    %63 = vector.shape_cast %62 : vector<16x128xf32> to vector<2x8x128xf32>
    %cst_34 = arith.constant dense<0.000000e+00> : vector<8x128xf32>
    %64 = vector.multi_reduction <add>, %63, %cst_34 [0] : vector<2x8x128xf32> to vector<8x128xf32>
    %65 = vector.shape_cast %64 : vector<8x128xf32> to vector<1x1x8x128xf32>
    %c0_35 = arith.constant 0 : index
    %c0_36 = arith.constant 0 : index
    %c0_37 = arith.constant 0 : index
    %c0_38 = arith.constant 0 : index
    %66 = vector.load %arg4[%c0_35, %c0_36, %c0_37, %c0_38] : memref<1x1x8x128xf32, #tpu.memory_space<vmem>>, vector<1x1x8x128xf32>
    tpu.vector_store %arg4[%c0_35, %c0_36, %c0_37, %c0_38], %65 {strides = array<i32>} : memref<1x1x8x128xf32, #tpu.memory_space<vmem>>, vector<1x1x8x128xf32>,
    %67 = vector.shape_cast %59 : vector<16x128xf32> to vector<2x8x128xf32>
    %cst_39 = arith.constant dense<0.000000e+00> : vector<8x128xf32>
    %68 = vector.multi_reduction <add>, %67, %cst_39 [0] : vector<2x8x128xf32> to vector<8x128xf32>
    %69 = vector.shape_cast %68 : vector<8x128xf32> to vector<1x1x8x128xf32>
    %c0_40 = arith.constant 0 : index
    %c0_41 = arith.constant 0 : index
    %c0_42 = arith.constant 0 : index
    %c0_43 = arith.constant 0 : index
    %70 = vector.load %arg5[%c0_40, %c0_41, %c0_42, %c0_43] : memref<1x1x8x128xf32, #tpu.memory_space<vmem>>, vector<1x1x8x128xf32>
    tpu.vector_store %arg5[%c0_40, %c0_41, %c0_42, %c0_43], %69 {strides = array<i32>} : memref<1x1x8x128xf32, #tpu.memory_space<vmem>>, vector<1x1x8x128xf32>,
    return
  }
  func.func @transform_0(%arg0: i32, %arg1: i32) -> (i32, i32, i32, i32) {
    %c0_i32 = arith.constant 0 : i32
    %c0_i32_0 = arith.constant 0 : i32
    %c0_i32_1 = arith.constant 0 : i32
    return %arg0, %c0_i32, %arg1, %c0_i32_0 : i32, i32, i32, i32
  }
  func.func @transform_1(%arg0: i32, %arg1: i32) -> (i32, i32, i32) {
    %c0_i32 = arith.constant 0 : i32
    %c0_i32_0 = arith.constant 0 : i32
    return %arg0, %arg1, %c0_i32 : i32, i32, i32
  }
  func.func @transform_2(%arg0: i32, %arg1: i32) -> (i32, i32, i32, i32) {
    %c0_i32 = arith.constant 0 : i32
    %c0_i32_0 = arith.constant 0 : i32
    %c0_i32_1 = arith.constant 0 : i32
    return %arg0, %arg1, %c0_i32, %c0_i32_0 : i32, i32, i32, i32
  }
  func.func @transform_3(%arg0: i32, %arg1: i32) -> (i32, i32, i32, i32) {
    %c0_i32 = arith.constant 0 : i32
    %c0_i32_0 = arith.constant 0 : i32
    %c0_i32_1 = arith.constant 0 : i32
    return %arg0, %arg1, %c0_i32, %c0_i32_0 : i32, i32, i32, i32
  }
}

</mosaic_0001>

<llo_original>
// kernel: tpu_custom_call.1
$region0: #{tpu_custom_call.1}
  #allocation0 [shape = 'u32[]', space=smem, size = 0x4, offset = 0x4, fixed_abs, tag = 'smem constant byte address 0x4 - core index']
  #allocation1 [shape = 'u32[144,128]{1,0:T(1,128)}', space=vmem, size = 0x12000, scoped, tag = 'internal scratch']
  %s0 = inlined_call_operand.hbm [shape: f32[2,4,16,128], index: 0, kind: input, shape index: {}]
  %s1 = inlined_call_operand.hbm [shape: s32[2,16,128], index: 1, kind: input, shape index: {}]
  %s2 = inlined_call_operand.hbm [shape: f32[2,1,8,128], index: 2, kind: output, shape index: {0}]
  %s3 = inlined_call_operand.hbm [shape: f32[2,1,8,128], index: 3, kind: output, shape index: {1}]
  %4 = xla_tuple %s2, %s3
  %s5 = sld [smem:[#allocation0]]
  $region57: #{tpu_custom_call.1} parent=0
    _
  %s7 = ssub.s32 1, %s5
  %s8 = scalar_select 0, %s7, %s5
  $region1: #{tpu_custom_call.1} parent=0
    #allocation2 [shape = 'u8[65536]{0}', space=vmem, size = 0x10000, scoped, tag = 'input window, operand 0']
    #allocation3 [shape = 's32[2]{0}', space=sflag, size = 0x8, scoped, tag = 'scoped memory for tpu_custom_call.1']
    #allocation4 [shape = 's32[2]{0}', space=sflag, size = 0x8, scoped, tag = 'scoped memory for tpu_custom_call.1']
    #allocation5 [shape = 'u8[16384]{0}', space=vmem, size = 0x4000, scoped, tag = 'input window, operand 1']
    #allocation6 [shape = 's32[2]{0}', space=sflag, size = 0x8, scoped, tag = 'scoped memory for tpu_custom_call.1']
    #allocation7 [shape = 'u8[8192]{0}', space=vmem, size = 0x2000, scoped, tag = 'output window, operand 0']
    #allocation8 [shape = 'u8[8192]{0}', space=vmem, size = 0x2000, scoped, tag = 'output window, operand 1']
    #allocation9 [shape = 's32[2]{0}', space=sflag, size = 0x8, scoped, tag = 'scoped memory for tpu_custom_call.1']
    %9 = vsyncpa [#allocation3], 0
    %s10 = scalar_lea.sflag [#allocation3], 1
    %11 = vsyncpa %s10, 0
    %12 = vsyncpa [#allocation6], 0
    %s13 = scalar_lea.sflag [#allocation6], 1
    %14 = vsyncpa %s13, 0
    %15 = vsyncpa [#allocation4], 0
    %s16 = scalar_lea.sflag [#allocation4], 1
    %17 = vsyncpa %s16, 0
    %18 = vsyncpa [#allocation9], 0
    %s19 = scalar_lea.sflag [#allocation9], 1
    %20 = vsyncpa %s19, 0
    loop: start=0, step=1, limit=4
    $region2: #{tpu_custom_call.1} parent=1 // loop_pre_header
      _
    $region3: #{tpu_custom_call.1} parent=1 // loop_header
      %s22 = sphi 0, %s26
      %p23 = scmp.ge.s32.totalorder %s22, 4
      %s29 = sphi 0, %s41
      %s30 = sphi 0, %s37
      %s31 = sphi 0, %s29
      %s32 = sphi 0, %s30
      %s33 = sphi 0, %s31
      %s34 = sphi 0, %s32
      %s46 = sphi 0, %s48
      %s49 = sphi 0, %s46
      %s50 = sphi 0, %s49
      %s66 = sphi 0, %s50
      %s74 = sphi 0, %s76
      %s77 = sphi 0, %s74
      %s78 = sphi 0, %s77
      %s94 = sphi 0, %s78
      %s102 = sphi 0, %s104
      %s105 = sphi 0, %s102
      %s106 = sphi 0, %s105
      %s122 = sphi 0, %s106
      %s130 = sphi 0, %s132
      %s133 = sphi 0, %s130
      %s134 = sphi 0, %s133
      %s150 = sphi 0, %s134
    $region4: #{tpu_custom_call.1} parent=1 // loop_header_branch
      %25 = sbr.rel (%p23) target = $region8
    $region5: #{tpu_custom_call.1} parent=1 // loop_body
      %s27 = ssub.s32 %s22, 1
      %s28 = ssub.s32 %s22, 2
      %s35 = sadd.s32 1, %s30
      %p36 = scmp.ge.s32.totalorder %s35, 1
      %s37 = scalar_select %p36, 0, %s35
      %s38 = sadd.s32 1, %s29
      %s39 = scalar_select %p36, %s38, %s29
      %p40 = scmp.ge.s32.totalorder %s39, 2
      %s41 = scalar_select %p40, 0, %s39
      %s42 = ssub.s32 %s29, %s41
      %s43 = ssub.s32 %s30, %s37
      %s44 = sor.u32 %s42, %s43
      %p45 = scmp.eq.s32.totalorder %s44, 0
      %s47 = sadd.s32 %s46, 1
      %s48 = scalar_select %p45, %s46, %s47
      %p51 = pneg %p45
      %p52 = scmp.eq.s32.totalorder %s22, 1
      %p53 = por %p51, %p52
      %p54 = scmp.ne.s32.totalorder %s46, %s49
      %p55 = scmp.eq.s32.totalorder %s22, 0
      %p56 = por %p54, %p55
      %p57 = scmp.ne.s32.totalorder %s46, %s49
      %p58 = scmp.eq.s32.totalorder %s27, 1
      %p59 = por %p57, %p58
      %p60 = scmp.ne.s32.totalorder %s49, %s50
      %p61 = scmp.eq.s32.totalorder %s27, 0
      %p62 = por %p60, %p61
      %p63 = scmp.ne.s32.totalorder %s49, %s50
      %p64 = scmp.eq.s32.totalorder %s28, 1
      %p65 = por %p63, %p64
      %p67 = scmp.ne.s32.totalorder %s50, %s66
      %p68 = scmp.eq.s32.totalorder %s28, 0
      %p69 = por %p67, %p68
      %s70 = ssub.s32 %s29, %s41
      %s71 = ssub.s32 %s30, %s37
      %s72 = sor.u32 %s70, %s71
      %p73 = scmp.eq.s32.totalorder %s72, 0
      %s75 = sadd.s32 %s74, 1
      %s76 = scalar_select %p73, %s74, %s75
      %p79 = pneg %p73
      %p80 = scmp.eq.s32.totalorder %s22, 1
      %p81 = por %p79, %p80
      %p82 = scmp.ne.s32.totalorder %s74, %s77
      %p83 = scmp.eq.s32.totalorder %s22, 0
      %p84 = por %p82, %p83
      %p85 = scmp.ne.s32.totalorder %s74, %s77
      %p86 = scmp.eq.s32.totalorder %s27, 1
      %p87 = por %p85, %p86
      %p88 = scmp.ne.s32.totalorder %s77, %s78
      %p89 = scmp.eq.s32.totalorder %s27, 0
      %p90 = por %p88, %p89
      %p91 = scmp.ne.s32.totalorder %s77, %s78
      %p92 = scmp.eq.s32.totalorder %s28, 1
      %p93 = por %p91, %p92
      %p95 = scmp.ne.s32.totalorder %s78, %s94
      %p96 = scmp.eq.s32.totalorder %s28, 0
      %p97 = por %p95, %p96
      %s98 = ssub.s32 %s29, %s41
      %s99 = ssub.s32 %s30, %s37
      %s100 = sor.u32 %s98, %s99
      %p101 = scmp.eq.s32.totalorder %s100, 0
      %s103 = sadd.s32 %s102, 1
      %s104 = scalar_select %p101, %s102, %s103
      %p107 = pneg %p101
      %p108 = scmp.eq.s32.totalorder %s22, 1
      %p109 = por %p107, %p108
      %p110 = scmp.ne.s32.totalorder %s102, %s105
      %p111 = scmp.eq.s32.totalorder %s22, 0
      %p112 = por %p110, %p111
      %p113 = scmp.ne.s32.totalorder %s102, %s105
      %p114 = scmp.eq.s32.totalorder %s27, 1
      %p115 = por %p113, %p114
      %p116 = scmp.ne.s32.totalorder %s105, %s106
      %p117 = scmp.eq.s32.totalorder %s27, 0
      %p118 = por %p116, %p117
      %p119 = scmp.ne.s32.totalorder %s105, %s106
      %p120 = scmp.eq.s32.totalorder %s28, 1
      %p121 = por %p119, %p120
      %p123 = scmp.ne.s32.totalorder %s106, %s122
      %p124 = scmp.eq.s32.totalorder %s28, 0
      %p125 = por %p123, %p124
      %s126 = ssub.s32 %s29, %s41
      %s127 = ssub.s32 %s30, %s37
      %s128 = sor.u32 %s126, %s127
      %p129 = scmp.eq.s32.totalorder %s128, 0
      %s131 = sadd.s32 %s130, 1
      %s132 = scalar_select %p129, %s130, %s131
      %p135 = pneg %p129
      %p136 = scmp.eq.s32.totalorder %s22, 1
      %p137 = por %p135, %p136
      %p138 = scmp.ne.s32.totalorder %s130, %s133
      %p139 = scmp.eq.s32.totalorder %s22, 0
      %p140 = por %p138, %p139
      %p141 = scmp.ne.s32.totalorder %s130, %s133
      %p142 = scmp.eq.s32.totalorder %s27, 1
      %p143 = por %p141, %p142
      %p144 = scmp.ne.s32.totalorder %s133, %s134
      %p145 = scmp.eq.s32.totalorder %s27, 0
      %p146 = por %p144, %p145
      %p147 = scmp.ne.s32.totalorder %s133, %s134
      %p148 = scmp.eq.s32.totalorder %s28, 1
      %p149 = por %p147, %p148
      %p151 = scmp.ne.s32.totalorder %s134, %s150
      %p152 = scmp.eq.s32.totalorder %s28, 0
      %p153 = por %p151, %p152
      %p154 = scmp.le.s32.totalorder 1, %s22
      %p155 = scmp.lt.s32.totalorder %s22, 3
      %p156 = pnand %p154, %p155
      %p157 = pneg %p156
      // Predicated region
      $region9: #{tpu_custom_call.1} parent=5 // pred_check
        _
      $region10: #{tpu_custom_call.1} parent=5 // pred_check_branch
        %159 = sbr.rel (%p156) target = $region12
      $region11: #{tpu_custom_call.1} parent=5 // pred_region
        %s160 = ssub.s32 %s22, 1
      $region12: #{tpu_custom_call.1} parent=5 // pred_fallthru
        _
      %p161 = scmp.lt.s32.totalorder %s22, 2
      // Predicated region
      $region13: #{tpu_custom_call.1} parent=5 // pred_check
        %p162 = pneg %p161
      $region14: #{tpu_custom_call.1} parent=5 // pred_check_branch
        %164 = sbr.rel (%p162) target = $region16
      $region15: #{tpu_custom_call.1} parent=5 // pred_region
        // Predicated region
        $region17: #{tpu_custom_call.1} parent=15 // pred_check
          %p165 = pneg %p56
        $region18: #{tpu_custom_call.1} parent=15 // pred_check_branch
          %167 = sbr.rel (%p165) target = $region20
        $region19: #{tpu_custom_call.1} parent=15 // pred_region
          %s168 = sand.u32 %s46, 1
          %s169 = scalar_lea.sflag [#allocation3], %s168
          %s170 = sand.u32 %s46, 1
          %s171 = smul.addr %s170, 64
          %s172 = scalar_lea.vmem [#allocation2], %s171
          %s173 = smul.u32 2, %s30
          %s175 = ssub.s32 1024, 1024
          %176 = vsyncadd %s169, %s175
          %s177 = smul.addr %s29, 8
          %s178 = sadd.s32 %s173, %s177
          %s179 = smul.addr %s178, 128
          %s180 = scalar_lea.hbm %s0, %s179
          %s181 = sshll.u32 %s172, 4
          %s182 = int_to_ptr.vmem [resolvable:$true] %s181
          %187 = dma.hbm_to_vmem [thread:$0]  %s180, 1024, %s182, %s169, 128, 128, 8
        $region20: #{tpu_custom_call.1} parent=15 // pred_fallthru
          _
        // Predicated region
        $region21: #{tpu_custom_call.1} parent=15 // pred_check
          %p188 = pneg %p84
        $region22: #{tpu_custom_call.1} parent=15 // pred_check_branch
          %190 = sbr.rel (%p188) target = $region24
        $region23: #{tpu_custom_call.1} parent=15 // pred_region
          %s191 = sand.u32 %s74, 1
          %s192 = scalar_lea.sflag [#allocation6], %s191
          %s193 = sand.u32 %s74, 1
          %s194 = smul.addr %s193, 16
          %s195 = scalar_lea.vmem [#allocation5], %s194
          %s196 = smul.u32 2, %s30
          %s198 = ssub.s32 256, 256
          %199 = vsyncadd %s192, %s198
          %s200 = smul.addr %s29, 2
          %s201 = sadd.s32 %s196, %s200
          %s202 = smul.addr %s201, 128
          %s203 = scalar_lea.hbm %s1, %s202
          %s204 = sshll.u32 %s195, 4
          %s205 = int_to_ptr.vmem [resolvable:$true] %s204
          %210 = dma.hbm_to_vmem [thread:$0]  %s203, 256, %s205, %s192, 128, 128, 8
        $region24: #{tpu_custom_call.1} parent=15 // pred_fallthru
          _
      $region16: #{tpu_custom_call.1} parent=5 // pred_fallthru
        _
      %p211 = scmp.le.s32.totalorder 1, %s22
      %p212 = scmp.lt.s32.totalorder %s22, 3
      %p213 = pnand %p211, %p212
      %p214 = pneg %p213
      // Predicated region
      $region25: #{tpu_custom_call.1} parent=5 // pred_check
        _
      $region26: #{tpu_custom_call.1} parent=5 // pred_check_branch
        %216 = sbr.rel (%p213) target = $region28
      $region27: #{tpu_custom_call.1} parent=5 // pred_region
        %s217 = ssub.s32 %s22, 1
        %s218 = sand.u32 %s49, 1
        %s219 = scalar_lea.sflag [#allocation3], %s218
        %s220 = sand.u32 %s49, 1
        %s221 = smul.addr %s220, 64
        %s222 = scalar_lea.vmem [#allocation2], %s221
        // Predicated region
        $region29: #{tpu_custom_call.1} parent=27 // pred_check
          %p223 = pneg %p62
        $region30: #{tpu_custom_call.1} parent=27 // pred_check_branch
          %225 = sbr.rel (%p223) target = $region32
        $region31: #{tpu_custom_call.1} parent=27 // pred_region
          %226 = dma.done %s219, 1024
        $region32: #{tpu_custom_call.1} parent=27 // pred_fallthru
          _
        %s227 = sand.u32 %s77, 1
        %s228 = scalar_lea.sflag [#allocation6], %s227
        %s229 = sand.u32 %s77, 1
        %s230 = smul.addr %s229, 16
        %s231 = scalar_lea.vmem [#allocation5], %s230
        // Predicated region
        $region33: #{tpu_custom_call.1} parent=27 // pred_check
          %p232 = pneg %p90
        $region34: #{tpu_custom_call.1} parent=27 // pred_check_branch
          %234 = sbr.rel (%p232) target = $region36
        $region35: #{tpu_custom_call.1} parent=27 // pred_region
          %235 = dma.done %s228, 256
        $region36: #{tpu_custom_call.1} parent=27 // pred_fallthru
          _
        %s236 = sand.u32 %s49, 1
        %s237 = scalar_lea.sflag [#allocation3], %s236
        %s238 = sand.u32 %s49, 1
        %s239 = smul.addr %s238, 64
        %s240 = scalar_lea.vmem [#allocation2], %s239
        %p241 = pneg %p62
        %p242 = pneg %p59
        %s243 = sand.u32 %s77, 1
        %s244 = scalar_lea.sflag [#allocation6], %s243
        %s245 = sand.u32 %s77, 1
        %s246 = smul.addr %s245, 16
        %s247 = scalar_lea.vmem [#allocation5], %s246
        %p248 = pneg %p90
        %p249 = pneg %p87
        %p250 = pneg %p118
        %p251 = pneg %p115
        %s252 = sand.u32 %s105, 1
        %s253 = scalar_lea.sflag [#allocation4], %s252
        %s254 = sand.u32 %s105, 1
        %s255 = smul.addr %s254, 8
        %s256 = scalar_lea.vmem [#allocation7], %s255
        %p257 = pneg %p146
        %p258 = pneg %p143
        %s259 = sand.u32 %s133, 1
        %s260 = scalar_lea.sflag [#allocation9], %s259
        %s261 = sand.u32 %s133, 1
        %s262 = smul.addr %s261, 8
        %s263 = scalar_lea.vmem [#allocation8], %s262
        %s264 = smul.u32 2, %s32
        %s265 = smul.u32 2, %s32
        %v266 = vld [vmem:[%s231] sm:$0xff]
        %v267 = vld [vmem:[%s231 + $0x8] sm:$0xff]
        %v268 = vld [vmem:[%s222] sm:$0xff]
        %v269 = vld [vmem:[%s222 + $0x8] sm:$0xff]
        %s270 = scalar_lea.vmem %s222, 16 [#allocation2]
        %v271 = vld [vmem:[%s270] sm:$0xff]
        %v272 = vld [vmem:[%s270 + $0x8] sm:$0xff]
        %v273 = vmax.f32 %v268, %v271
        %v274 = vmax.f32 %v269, %v272
        %s275 = scalar_lea.vmem %s222, 32 [#allocation2]
        %v276 = vld [vmem:[%s275] sm:$0xff]
        %v277 = vld [vmem:[%s275 + $0x8] sm:$0xff]
        %v278 = vmax.f32 %v273, %v276
        %v279 = vmax.f32 %v274, %v277
        %s280 = scalar_lea.vmem %s222, 48 [#allocation2]
        %v281 = vld [vmem:[%s280] sm:$0xff]
        %v282 = vld [vmem:[%s280 + $0x8] sm:$0xff]
        %v283 = vmax.f32 %v278, %v281
        %v284 = vmax.f32 %v279, %v282
        %v285 = vsub.f32 %v268, %v283
        %v286 = vsub.f32 %v269, %v284
        %v287 = vmul.f32 %v285, 1.442695
        %v288 = vpow.pop %v287
        %v289 = vmul.f32 %v286, 1.442695
        %v290 = vpow.pop %v289
        %v291 = vadd.f32 %v288, 0.0
        %v292 = vadd.f32 %v290, 0.0
        %vm293 = vcmp.eq.s32.totalorder %v266, 0
        %vm294 = vcmp.eq.s32.totalorder %v267, 0
        %v295 = vsel %vm293, %v268, 0.0
        %v296 = vsel %vm294, %v269, 0.0
        %v297 = vsub.f32 %v271, %v283
        %v298 = vsub.f32 %v272, %v284
        %v299 = vmul.f32 %v297, 1.442695
        %v300 = vpow.pop %v299
        %v301 = vmul.f32 %v298, 1.442695
        %v302 = vpow.pop %v301
        %v303 = vadd.f32 %v291, %v300
        %v304 = vadd.f32 %v292, %v302
        %vm305 = vcmp.eq.s32.totalorder %v266, 1
        %vm306 = vcmp.eq.s32.totalorder %v267, 1
        %v307 = vsel %vm305, %v271, %v295
        %v308 = vsel %vm306, %v272, %v296
        %v309 = vsub.f32 %v276, %v283
        %v310 = vsub.f32 %v277, %v284
        %v311 = vmul.f32 %v309, 1.442695
        %v312 = vpow.pop %v311
        %v313 = vmul.f32 %v310, 1.442695
        %v314 = vpow.pop %v313
        %v315 = vadd.f32 %v303, %v312
        %v316 = vadd.f32 %v304, %v314
        %vm317 = vcmp.eq.s32.totalorder %v266, 2
        %vm318 = vcmp.eq.s32.totalorder %v267, 2
        %v319 = vsel %vm317, %v276, %v307
        %v320 = vsel %vm318, %v277, %v308
        %v321 = vsub.f32 %v281, %v283
        %v322 = vsub.f32 %v282, %v284
        %v323 = vmul.f32 %v321, 1.442695
        %v324 = vpow.pop %v323
        %v325 = vmul.f32 %v322, 1.442695
        %v326 = vpow.pop %v325
        %v327 = vadd.f32 %v315, %v324
        %v328 = vadd.f32 %v316, %v326
        %vm329 = vcmp.eq.s32.totalorder %v266, 3
        %vm330 = vcmp.eq.s32.totalorder %v267, 3
        %v331 = vsel %vm329, %v281, %v319
        %v332 = vsel %vm330, %v282, %v320
        %v333 = vlog2.pop %v327
        %v334 = vmul.f32 %v333, 0.6931472
        %v335 = vlog2.pop %v328
        %v336 = vmul.f32 %v335, 0.6931472
        %v337 = vadd.f32 %v283, %v334
        %v338 = vadd.f32 %v284, %v336
        %v339 = vsub.f32 %v337, %v331
        %v340 = vsub.f32 %v338, %v332
        %vm341 = vcmp.ge.s32.totalorder %v266, 0
        %vm342 = vcmp.ge.s32.totalorder %v267, 0
        %vm343 = vcmp.lt.s32.totalorder %v266, 4
        %vm344 = vcmp.lt.s32.totalorder %v267, 4
        %vm345 = vmand %vm341, %vm343
        %vm346 = vmand %vm342, %vm344
        %vm347 = vcmp.ne.s32.totalorder %v266, 255
        %vm348 = vcmp.ne.s32.totalorder %v267, 255
        %vm349 = vmand %vm345, %vm347
        %vm350 = vmand %vm346, %vm348
        %v351 = vsel %vm349, 1, 0
        %v352 = vsel %vm350, 1, 0
        %v353 = vcvt.s32.f32 %v351
        %v354 = vcvt.s32.f32 %v352
        %v355 = vsel %vm349, %v339, 0.0
        %v356 = vsel %vm350, %v340, 0.0
        %v357 = vmul.f32 %v353, %v355
        %v358 = vmul.f32 %v354, %v356
        %v359 = vadd.f32 %v357, %v358
        %360 = vst [vmem:[%s256] sm:$0xff] %v359
        %v361 = vadd.f32 %v353, %v354
        %362 = vst [vmem:[%s263] sm:$0xff] %v361
        %s363 = sand.u32 %s105, 1
        %s364 = scalar_lea.sflag [#allocation4], %s363
        %s365 = sand.u32 %s105, 1
        %s366 = smul.addr %s365, 8
        %s367 = scalar_lea.vmem [#allocation7], %s366
        %s368 = sand.u32 %s133, 1
        %s369 = scalar_lea.sflag [#allocation9], %s368
        %s370 = sand.u32 %s133, 1
        %s371 = smul.addr %s370, 8
        %s372 = scalar_lea.vmem [#allocation8], %s371
        // Predicated region
        $region37: #{tpu_custom_call.1} parent=27 // pred_check
          %p373 = pneg %p115
        $region38: #{tpu_custom_call.1} parent=27 // pred_check_branch
          %375 = sbr.rel (%p373) target = $region40
        $region39: #{tpu_custom_call.1} parent=27 // pred_region
          %s377 = ssub.s32 128, 128
          %378 = vsyncadd %s364, %s377
          %s379 = sadd.s32 %s32, %s31
          %s380 = smul.addr %s379, 128
          %s381 = scalar_lea.hbm %s2, %s380
          %s383 = sshll.u32 %s367, 4
          %s384 = int_to_ptr.vmem [resolvable:$true] %s383
          %386 = dma.vmem_to_hbm [thread:$0]  %s384, 128, %s381, %s364
        $region40: #{tpu_custom_call.1} parent=27 // pred_fallthru
          _
        // Predicated region
        $region41: #{tpu_custom_call.1} parent=27 // pred_check
          %p387 = pneg %p143
        $region42: #{tpu_custom_call.1} parent=27 // pred_check_branch
          %389 = sbr.rel (%p387) target = $region44
        $region43: #{tpu_custom_call.1} parent=27 // pred_region
          %s391 = ssub.s32 128, 128
          %392 = vsyncadd %s369, %s391
          %s393 = sadd.s32 %s32, %s31
          %s394 = smul.addr %s393, 128
          %s395 = scalar_lea.hbm %s3, %s394
          %s397 = sshll.u32 %s372, 4
          %s398 = int_to_ptr.vmem [resolvable:$true] %s397
          %400 = dma.vmem_to_hbm [thread:$0]  %s398, 128, %s395, %s369
        $region44: #{tpu_custom_call.1} parent=27 // pred_fallthru
          _
      $region28: #{tpu_custom_call.1} parent=5 // pred_fallthru
        _
      %p401 = scmp.le.s32.totalorder 2, %s22
      // Predicated region
      $region45: #{tpu_custom_call.1} parent=5 // pred_check
        %p402 = pneg %p401
      $region46: #{tpu_custom_call.1} parent=5 // pred_check_branch
        %404 = sbr.rel (%p402) target = $region48
      $region47: #{tpu_custom_call.1} parent=5 // pred_region
        %s405 = ssub.s32 %s22, 2
        // Predicated region
        $region49: #{tpu_custom_call.1} parent=47 // pred_check
          %p406 = pneg %p121
        $region50: #{tpu_custom_call.1} parent=47 // pred_check_branch
          %408 = sbr.rel (%p406) target = $region52
        $region51: #{tpu_custom_call.1} parent=47 // pred_region
          %s409 = sand.u32 %s106, 1
          %s410 = scalar_lea.sflag [#allocation4], %s409
          %s411 = sand.u32 %s106, 1
          %s412 = smul.addr %s411, 8
          %s413 = scalar_lea.vmem [#allocation7], %s412
          %414 = dma.done %s410, 128
        $region52: #{tpu_custom_call.1} parent=47 // pred_fallthru
          _
        // Predicated region
        $region53: #{tpu_custom_call.1} parent=47 // pred_check
          %p415 = pneg %p149
        $region54: #{tpu_custom_call.1} parent=47 // pred_check_branch
          %417 = sbr.rel (%p415) target = $region56
        $region55: #{tpu_custom_call.1} parent=47 // pred_region
          %s418 = sand.u32 %s134, 1
          %s419 = scalar_lea.sflag [#allocation9], %s418
          %s420 = sand.u32 %s134, 1
          %s421 = smul.addr %s420, 8
          %s422 = scalar_lea.vmem [#allocation8], %s421
          %423 = dma.done %s419, 128
        $region56: #{tpu_custom_call.1} parent=47 // pred_fallthru
          _
      $region48: #{tpu_custom_call.1} parent=5 // pred_fallthru
        _
    $region6: #{tpu_custom_call.1} parent=1 // loop_footer
      %s26 = sadd.s32 1, %s22
    $region7: #{tpu_custom_call.1} parent=1 // loop_footer_branch
      %21 = sbr.rel target = $region3
    $region8: #{tpu_custom_call.1} parent=1 // loop_exit
      _
    %424 = vsyncpa [#allocation3], 1
    %s425 = scalar_lea.sflag [#allocation3], 1
    %426 = vsyncpa %s425, 1
    %427 = vsyncpa [#allocation6], 1
    %s428 = scalar_lea.sflag [#allocation6], 1
    %429 = vsyncpa %s428, 1
    %430 = vsyncpa [#allocation4], 1
    %s431 = scalar_lea.sflag [#allocation4], 1
    %432 = vsyncpa %s431, 1
    %433 = vsyncpa [#allocation9], 1
    %s434 = scalar_lea.sflag [#allocation9], 1
    %435 = vsyncpa %s434, 1

</llo_original>
